<compile_context>
chip_gen: v5e
topology: v5e:2x2
jax: 0.10.0
libtpu: 0.0.40
codegen_flags: <defaults>
</compile_context>

<pallas_src>
import functools

import jax
import jax.numpy as jnp
from jax.experimental import pallas as pl
from jax.experimental.pallas import tpu as pltpu

EPS = 1e-12  # matches l2normalize eps


# ---------------------------------------------------------------------------
# Kernel 1: SpectralNorm._update_u_v  (power iteration + sigma)
# ---------------------------------------------------------------------------
def _sn_update_kernel(w2d_ref, u_ref, v_ref, u_out, v_out, sigma_out,
                      *, power_iterations):
    # w2d_ref : (hgt, wdt)  = w_bar.view(C_out, -1)
    # u_ref   : (hgt, 1)
    # v_ref   : (1, wdt)
    w2d = w2d_ref[...]
    u = u_ref[...]
    v = v_ref[...]
    for _ in range(power_iterations):
        # v = l2normalize(W^T u)
        v_raw = jnp.sum(w2d * u, axis=0, keepdims=True)                 # (1, wdt)
        v_nrm = jnp.sqrt(jnp.sum(v_raw * v_raw, axis=1, keepdims=True))  # (1, 1)
        v = v_raw / (v_nrm + EPS)
        # u = l2normalize(W v)
        u_raw = jnp.sum(w2d * v, axis=1, keepdims=True)                 # (hgt, 1)
        u_nrm = jnp.sqrt(jnp.sum(u_raw * u_raw, axis=0, keepdims=True))  # (1, 1)
        u = u_raw / (u_nrm + EPS)
    wv = jnp.sum(w2d * v, axis=1, keepdims=True)                        # (hgt,1)=Wv
    sigma = jnp.sum(u * wv, axis=0, keepdims=True)                       # (1, 1)
    u_out[...] = u
    v_out[...] = v
    sigma_out[...] = sigma


@functools.lru_cache(maxsize=None)
def _make_sn_update(hgt, wdt, power_iterations):
    kernel = functools.partial(_sn_update_kernel,
                               power_iterations=power_iterations)
    return pl.pallas_call(
        kernel,
        out_shape=(jax.ShapeDtypeStruct((hgt, 1), jnp.float32),
                   jax.ShapeDtypeStruct((1, wdt), jnp.float32),
                   jax.ShapeDtypeStruct((1, 1), jnp.float32)),
    )


# ---------------------------------------------------------------------------
# Kernel 2: wrapped module forward — conv3x3(pad=1) with w_bar/sigma + bias
# ---------------------------------------------------------------------------
def _sn_conv_kernel(x_ref, m_ref, b_ref, sig_ref, o_ref, xp_ref,
                    *, H, W, C_in, C_out, KH, KW):
    # x_ref  : (1, H, W*C_in)          one batch element, lanes = (w, ci)
    # m_ref  : (KH, W*C_in, W*C_out)   banded conv-as-matmul weight (unnormalized)
    # b_ref  : (1, W*C_out)            conv bias tiled along W
    # sig_ref: (1, 1)                  spectral-norm sigma
    # o_ref  : (1, H, W*C_out)         lane-dense output rows
    # xp_ref : (H+KH-1, W*C_in)        row-padded activation scratch (VMEM)
    PH = H + KH - 1
    off_h = (KH - 1) // 2

    # ZeroPad2d rows done in VMEM; the W-direction zero padding is folded into
    # the banded weight matrix (out-of-range columns simply have no band rows).
    xp_ref[...] = jnp.zeros((PH, W * C_in), jnp.float32)
    xp_ref[off_h:off_h + H, :] = x_ref[0]

    # 3x3 conv == KH banded matmuls: one MXU contraction per dy tap, producing
    # a lane-dense (H, W*C_out) result with no reshapes/concats in the kernel.
    acc = jnp.zeros((H, W * C_out), jnp.float32)
    for dy in range(KH):
        acc = acc + jnp.dot(xp_ref[dy:dy + H, :], m_ref[dy],
                            preferred_element_type=jnp.float32)

    # Spectral normalization (conv is linear in the weight) + bias.
    inv_sigma = 1.0 / sig_ref[0, 0]
    o_ref[0] = acc * inv_sigma + b_ref[...]


@functools.lru_cache(maxsize=None)
def _make_sn_conv(B, H, W, C_in, C_out, KH, KW):
    NW = W * C_out
    kernel = functools.partial(_sn_conv_kernel, H=H, W=W, C_in=C_in,
                               C_out=C_out, KH=KH, KW=KW)
    return pl.pallas_call(
        kernel,
        out_shape=jax.ShapeDtypeStruct((B, H, NW), jnp.float32),
        grid=(B,),
        in_specs=[
            pl.BlockSpec((1, H, W * C_in), lambda b: (b, 0, 0)),   # activations
            pl.BlockSpec((KH, W * C_in, NW), lambda b: (0, 0, 0)),  # banded W
            pl.BlockSpec((1, NW), lambda b: (0, 0)),                # tiled bias
            pl.BlockSpec((1, 1), lambda b: (0, 0)),                 # sigma
        ],
        out_specs=pl.BlockSpec((1, H, NW), lambda b: (b, 0, 0)),
        scratch_shapes=[pltpu.VMEM((H + KH - 1, W * C_in), jnp.float32)],
        compiler_params=pltpu.CompilerParams(
            dimension_semantics=("parallel",)),
    )


# ---------------------------------------------------------------------------
# Forward wrapper
# ---------------------------------------------------------------------------
def spectral_norm_conv_forward(params, x_nchw, power_iterations=1):
    """Forward of SpectralNorm(nn.Conv2d(C_in, C_out, 3, stride=1, padding=1)).

    Returns (y_nchw, u_new, v_new, sigma).  u/v are the power-iteration buffers
    PyTorch mutates in place; they are returned functionally here.
    """
    w_bar = params['weight_bar'].astype(jnp.float32)   # (C_out, C_in, KH, KW)
    bias = params['bias'].astype(jnp.float32)          # (C_out,)
    u0 = params['weight_u'].astype(jnp.float32)        # (C_out,)
    v0 = params['weight_v'].astype(jnp.float32)        # (C_in*KH*KW,)

    C_out, C_in, KH, KW = w_bar.shape
    B, _, H, W = x_nchw.shape
    width = C_in * KH * KW

    # --- Pallas kernel 1: power iteration + sigma --------------------------
    u_new, v_new, sigma = _make_sn_update(C_out, width, power_iterations)(
        w_bar.reshape(C_out, width),
        u0.reshape(C_out, 1),
        v0.reshape(1, width))

    # --- layout plumbing (tiny, wrapper-side): banded conv-as-matmul weight --
    # m[dy, w_in*C_in + ci, w*C_out + co] = w_bar[co, ci, dy, dx]
    #   with w_in = w + dx - pad_w (rows outside [0, W) dropped == zero pad).
    w_perm = jnp.transpose(w_bar, (2, 3, 1, 0))         # (KH, KW, C_in, C_out)
    pad_w = (KW - 1) // 2
    bands = []
    for dy in range(KH):
        band = jnp.zeros((W * C_in, W * C_out), jnp.float32)
        for dx in range(KW):
            shift = jnp.eye(W, k=-(dx - pad_w), dtype=jnp.float32)
            band = band + jnp.kron(shift, w_perm[dy, dx])
        bands.append(band)
    m = jnp.stack(bands, axis=0)                         # (KH, W*C_in, W*C_out)
    b_row = jnp.tile(bias.reshape(1, C_out), (1, W))     # (1, W*C_out)

    # activations as lane-dense (H, W*C_in) rows
    x_rows = jnp.transpose(x_nchw.astype(jnp.float32),
                           (0, 2, 3, 1)).reshape(B, H, W * C_in)

    # --- Pallas kernel 2: fused (w_bar / sigma) conv + bias -----------------
    y_rows = _make_sn_conv(B, H, W, C_in, C_out, KH, KW)(x_rows, m, b_row, sigma)
    y = jnp.transpose(y_rows.reshape(B, H, W, C_out), (0, 3, 1, 2))   # NCHW

    return y, u_new.reshape(C_out), v_new.reshape(width), sigma.reshape(())


# ---------------------------------------------------------------------------
# Pure-JAX reference (mirrors the PyTorch module exactly)
# ---------------------------------------------------------------------------
def _reference_forward(params, x_nchw, power_iterations=1):
    w = params['weight_bar'].astype(jnp.float32)
    b = params['bias'].astype(jnp.float32)
    u = params['weight_u'].astype(jnp.float32)
    v = params['weight_v'].astype(jnp.float32)
    C_out = w.shape[0]
    w2d = w.reshape(C_out, -1)
    hi = jax.lax.Precision.HIGHEST
    for _ in range(power_iterations):
        v = jnp.matmul(w2d.T, u, precision=hi)
        v = v / (jnp.linalg.norm(v) + EPS)
        u = jnp.matmul(w2d, v, precision=hi)
        u = u / (jnp.linalg.norm(u) + EPS)
    sigma = jnp.sum(u * jnp.matmul(w2d, v, precision=hi))
    w_sn = w / sigma
    y = jax.lax.conv_general_dilated(
        x_nchw.astype(jnp.float32), w_sn, window_strides=(1, 1),
        padding=((1, 1), (1, 1)),
        dimension_numbers=('NCHW', 'OIHW', 'NCHW'),
        precision=hi)
    y = y + b[None, :, None, None]
    return y, u, v, sigma


if __name__ == "__main__":
    B, C_in, H, W = 2, 4, 16, 16
    C_out, KH, KW = 8, 3, 3

    key = jax.random.PRNGKey(0)
    kx, kw, kb, ku, kv = jax.random.split(key, 5)
    x = jax.random.normal(kx, (B, C_in, H, W), jnp.float32)
    w_bar = 0.1 * jax.random.normal(kw, (C_out, C_in, KH, KW), jnp.float32)
    bias = 0.1 * jax.random.normal(kb, (C_out,), jnp.float32)
    u0 = jax.random.normal(ku, (C_out,), jnp.float32)
    v0 = jax.random.normal(kv, (C_in * KH * KW,), jnp.float32)
    u0 = u0 / (jnp.linalg.norm(u0) + EPS)   # SpectralNorm._make_params init
    v0 = v0 / (jnp.linalg.norm(v0) + EPS)

    params = {'weight_bar': w_bar, 'bias': bias, 'weight_u': u0, 'weight_v': v0}

    fwd = jax.jit(spectral_norm_conv_forward)
    y, u_new, v_new, sigma = fwd(params, x)
    jax.block_until_ready((y, u_new, v_new, sigma))

    y_exp, u_exp, v_exp, sigma_exp = _reference_forward(params, x)

    assert y.shape == (B, C_out, H, W)
    assert bool(jnp.all(jnp.isfinite(y)))
    assert bool(jnp.allclose(u_new, u_exp, rtol=1e-4, atol=1e-4))
    assert bool(jnp.allclose(v_new, v_exp, rtol=1e-4, atol=1e-4))
    assert bool(jnp.allclose(sigma, sigma_exp, rtol=1e-4, atol=1e-4))
    assert bool(jnp.allclose(y, y_exp, rtol=2e-3, atol=2e-3))
    print("KERNEL_OK")
</pallas_src>

<mosaic_0001>
module attributes {stable_mosaic.version = 11 : i64} {
  func.func @_sn_update_kernel(%arg0: memref<8x36xf32, #tpu.memory_space<vmem>>, %arg1: memref<8x1xf32, #tpu.memory_space<vmem>>, %arg2: memref<1x36xf32, #tpu.memory_space<vmem>>, %arg3: memref<8x1xf32, #tpu.memory_space<vmem>>, %arg4: memref<1x36xf32, #tpu.memory_space<vmem>>, %arg5: memref<1x1xf32, #tpu.memory_space<vmem>>) attributes {dimension_semantics = [], scalar_prefetch = 0 : i64, scratch_operands = 0 : i64, tpu.core_type = #tpu.core_type<tc>} {
    %c0 = arith.constant 0 : index
    %c0_0 = arith.constant 0 : index
    %0 = vector.load %arg0[%c0, %c0_0] : memref<8x36xf32, #tpu.memory_space<vmem>>, vector<8x36xf32>
    %c0_1 = arith.constant 0 : index
    %c0_2 = arith.constant 0 : index
    %1 = vector.load %arg1[%c0_1, %c0_2] : memref<8x1xf32, #tpu.memory_space<vmem>>, vector<8x1xf32>
    %2 = vector.broadcast %1 : vector<8x1xf32> to vector<8x36xf32>
    %3 = arith.mulf %0, %2 : vector<8x36xf32>
    %cst = arith.constant dense<0.000000e+00> : vector<36xf32>
    %4 = vector.multi_reduction <add>, %3, %cst [0] : vector<8x36xf32> to vector<36xf32>
    %5 = vector.shape_cast %4 : vector<36xf32> to vector<1x36xf32>
    %6 = arith.mulf %5, %5 : vector<1x36xf32>
    %cst_3 = arith.constant dense<0.000000e+00> : vector<1xf32>
    %7 = vector.multi_reduction <add>, %6, %cst_3 [1] : vector<1x36xf32> to vector<1xf32>
    %8 = vector.shape_cast %7 : vector<1xf32> to vector<1x1xf32>
    %9 = math.sqrt %8 : vector<1x1xf32>
    %cst_4 = arith.constant 9.99999996E-13 : f32
    %10 = vector.broadcast %cst_4 : f32 to vector<1x1xf32>
    %11 = arith.addf %9, %10 : vector<1x1xf32>
    %12 = vector.broadcast %11 : vector<1x1xf32> to vector<1x36xf32>
    %13 = arith.divf %5, %12 : vector<1x36xf32>
    %14 = vector.broadcast %13 : vector<1x36xf32> to vector<8x36xf32>
    %15 = arith.mulf %0, %14 : vector<8x36xf32>
    %cst_5 = arith.constant dense<0.000000e+00> : vector<8xf32>
    %16 = vector.multi_reduction <add>, %15, %cst_5 [1] : vector<8x36xf32> to vector<8xf32>
    %17 = vector.shape_cast %16 : vector<8xf32> to vector<8x1xf32>
    %18 = arith.mulf %17, %17 : vector<8x1xf32>
    %cst_6 = arith.constant dense<0.000000e+00> : vector<1xf32>
    %19 = vector.multi_reduction <add>, %18, %cst_6 [0] : vector<8x1xf32> to vector<1xf32>
    %20 = vector.shape_cast %19 : vector<1xf32> to vector<1x1xf32>
    %21 = math.sqrt %20 : vector<1x1xf32>
    %cst_7 = arith.constant 9.99999996E-13 : f32
    %22 = vector.broadcast %cst_7 : f32 to vector<1x1xf32>
    %23 = arith.addf %21, %22 : vector<1x1xf32>
    %24 = vector.broadcast %23 : vector<1x1xf32> to vector<8x1xf32>
    %25 = arith.divf %17, %24 : vector<8x1xf32>
    %26 = vector.broadcast %13 : vector<1x36xf32> to vector<8x36xf32>
    %27 = arith.mulf %0, %26 : vector<8x36xf32>
    %cst_8 = arith.constant dense<0.000000e+00> : vector<8xf32>
    %28 = vector.multi_reduction <add>, %27, %cst_8 [1] : vector<8x36xf32> to vector<8xf32>
    %29 = vector.shape_cast %28 : vector<8xf32> to vector<8x1xf32>
    %30 = arith.mulf %25, %29 : vector<8x1xf32>
    %cst_9 = arith.constant dense<0.000000e+00> : vector<1xf32>
    %31 = vector.multi_reduction <add>, %30, %cst_9 [0] : vector<8x1xf32> to vector<1xf32>
    %32 = vector.shape_cast %31 : vector<1xf32> to vector<1x1xf32>
    %c0_10 = arith.constant 0 : index
    %c0_11 = arith.constant 0 : index
    %33 = vector.load %arg3[%c0_10, %c0_11] : memref<8x1xf32, #tpu.memory_space<vmem>>, vector<8x1xf32>
    tpu.vector_store %arg3[%c0_10, %c0_11], %25 {strides = array<i32>} : memref<8x1xf32, #tpu.memory_space<vmem>>, vector<8x1xf32>,
    %c0_12 = arith.constant 0 : index
    %c0_13 = arith.constant 0 : index
    %34 = vector.load %arg4[%c0_12, %c0_13] : memref<1x36xf32, #tpu.memory_space<vmem>>, vector<1x36xf32>
    tpu.vector_store %arg4[%c0_12, %c0_13], %13 {strides = array<i32>} : memref<1x36xf32, #tpu.memory_space<vmem>>, vector<1x36xf32>,
    %c0_14 = arith.constant 0 : index
    %c0_15 = arith.constant 0 : index
    %35 = vector.load %arg5[%c0_14, %c0_15] : memref<1x1xf32, #tpu.memory_space<vmem>>, vector<1x1xf32>
    tpu.vector_store %arg5[%c0_14, %c0_15], %32 {strides = array<i32>} : memref<1x1xf32, #tpu.memory_space<vmem>>, vector<1x1xf32>,
    return
  }
}

module attributes {stable_mosaic.version = 11 : i64} {
  func.func @_sn_conv_kernel(%arg0: i32, %arg1: memref<1x16x64xf32, #tpu.memory_space<vmem>>, %arg2: memref<3x64x128xf32, #tpu.memory_space<vmem>>, %arg3: memref<1x128xf32, #tpu.memory_space<vmem>>, %arg4: memref<1x1xf32, #tpu.memory_space<vmem>>, %arg5: memref<1x16x128xf32, #tpu.memory_space<vmem>>, %arg6: memref<18x64xf32, #tpu.memory_space<vmem>>) attributes {dimension_semantics = [#tpu.dimension_semantics<parallel>], iteration_bounds = array<i64: 2>, scalar_prefetch = 0 : i64, scratch_operands = 1 : i64, tpu.core_type = #tpu.core_type<tc>, window_params = [{transform_indices = @transform_0, window_bounds = array<i64: 1, 16, 64>}, {pipeline_mode = #tpu.pipeline_mode<synchronous>, transform_indices = @transform_1, window_bounds = array<i64: 3, 64, 128>}, {pipeline_mode = #tpu.pipeline_mode<synchronous>, transform_indices = @transform_2, window_bounds = array<i64: 1, 128>}, {pipeline_mode = #tpu.pipeline_mode<synchronous>, transform_indices = @transform_3, window_bounds = array<i64: 1, 1>}, {transform_indices = @transform_4, window_bounds = array<i64: 1, 16, 128>}]} {
    %cst = arith.constant 0.000000e+00 : f32
    %0 = vector.broadcast %cst : f32 to vector<18x64xf32>
    %c0 = arith.constant 0 : index
    %c0_0 = arith.constant 0 : index
    %1 = vector.load %arg6[%c0, %c0_0] : memref<18x64xf32, #tpu.memory_space<vmem>>, vector<18x64xf32>
    tpu.vector_store %arg6[%c0, %c0_0], %0 {strides = array<i32>} : memref<18x64xf32, #tpu.memory_space<vmem>>, vector<18x64xf32>,
    %c0_1 = arith.constant 0 : index
    %c0_2 = arith.constant 0 : index
    %c0_3 = arith.constant 0 : index
    %2 = vector.load %arg1[%c0_1, %c0_2, %c0_3] : memref<1x16x64xf32, #tpu.memory_space<vmem>>, vector<1x16x64xf32>
    %3 = vector.shape_cast %2 : vector<1x16x64xf32> to vector<16x64xf32>
    %c1 = arith.constant 1 : index
    %c0_4 = arith.constant 0 : index
    %4 = vector.load %arg6[%c1, %c0_4] : memref<18x64xf32, #tpu.memory_space<vmem>>, vector<16x64xf32>
    tpu.vector_store %arg6[%c1, %c0_4], %3 {strides = array<i32>} : memref<18x64xf32, #tpu.memory_space<vmem>>, vector<16x64xf32>,
    %cst_5 = arith.constant 0.000000e+00 : f32
    %5 = vector.broadcast %cst_5 : f32 to vector<16x128xf32>
    %c0_6 = arith.constant 0 : index
    %c0_7 = arith.constant 0 : index
    %6 = vector.load %arg6[%c0_6, %c0_7] : memref<18x64xf32, #tpu.memory_space<vmem>>, vector<16x64xf32>
    %c0_8 = arith.constant 0 : index
    %c0_9 = arith.constant 0 : index
    %c0_10 = arith.constant 0 : index
    %7 = vector.load %arg2[%c0_8, %c0_9, %c0_10] : memref<3x64x128xf32, #tpu.memory_space<vmem>>, vector<1x64x128xf32>
    %8 = vector.shape_cast %7 : vector<1x64x128xf32> to vector<64x128xf32>
    %cst_11 = arith.constant dense<0.000000e+00> : vector<16x128xf32>
    %9 = tpu.matmul %6, %8, %cst_11 {dimension_numbers = #tpu.dot_dimension_numbers<[1], [0], [0], [1], [0, 0, 1, 1], [], []>} : vector<16x64xf32>, vector<64x128xf32>, vector<16x128xf32> -> vector<16x128xf32>
    %10 = arith.addf %5, %9 : vector<16x128xf32>
    %c1_12 = arith.constant 1 : index
    %c0_13 = arith.constant 0 : index
    %11 = vector.load %arg6[%c1_12, %c0_13] : memref<18x64xf32, #tpu.memory_space<vmem>>, vector<16x64xf32>
    %c1_14 = arith.constant 1 : index
    %c0_15 = arith.constant 0 : index
    %c0_16 = arith.constant 0 : index
    %12 = vector.load %arg2[%c1_14, %c0_15, %c0_16] : memref<3x64x128xf32, #tpu.memory_space<vmem>>, vector<1x64x128xf32>
    %13 = vector.shape_cast %12 : vector<1x64x128xf32> to vector<64x128xf32>
    %cst_17 = arith.constant dense<0.000000e+00> : vector<16x128xf32>
    %14 = tpu.matmul %11, %13, %cst_17 {dimension_numbers = #tpu.dot_dimension_numbers<[1], [0], [0], [1], [0, 0, 1, 1], [], []>} : vector<16x64xf32>, vector<64x128xf32>, vector<16x128xf32> -> vector<16x128xf32>
    %15 = arith.addf %10, %14 : vector<16x128xf32>
    %c2 = arith.constant 2 : index
    %c0_18 = arith.constant 0 : index
    %16 = vector.load %arg6[%c2, %c0_18] : memref<18x64xf32, #tpu.memory_space<vmem>>, vector<16x64xf32>
    %c2_19 = arith.constant 2 : index
    %c0_20 = arith.constant 0 : index
    %c0_21 = arith.constant 0 : index
    %17 = vector.load %arg2[%c2_19, %c0_20, %c0_21] : memref<3x64x128xf32, #tpu.memory_space<vmem>>, vector<1x64x128xf32>
    %18 = vector.shape_cast %17 : vector<1x64x128xf32> to vector<64x128xf32>
    %cst_22 = arith.constant dense<0.000000e+00> : vector<16x128xf32>
    %19 = tpu.matmul %16, %18, %cst_22 {dimension_numbers = #tpu.dot_dimension_numbers<[1], [0], [0], [1], [0, 0, 1, 1], [], []>} : vector<16x64xf32>, vector<64x128xf32>, vector<16x128xf32> -> vector<16x128xf32>
    %20 = arith.addf %15, %19 : vector<16x128xf32>
    %c0_23 = arith.constant 0 : index
    %c0_24 = arith.constant 0 : index
    %21 = vector.load %arg4[%c0_23, %c0_24] : memref<1x1xf32, #tpu.memory_space<vmem>>, vector<1x1xf32>
    %22 = vector.extract %21[0, 0] : f32 from vector<1x1xf32>
    %cst_25 = arith.constant 1.000000e+00 : f32
    %23 = arith.divf %cst_25, %22 : f32
    %24 = vector.broadcast %23 : f32 to vector<16x128xf32>
    %25 = arith.mulf %20, %24 : vector<16x128xf32>
    %c0_26 = arith.constant 0 : index
    %c0_27 = arith.constant 0 : index
    %26 = vector.load %arg3[%c0_26, %c0_27] : memref<1x128xf32, #tpu.memory_space<vmem>>, vector<1x128xf32>
    %27 = vector.broadcast %26 : vector<1x128xf32> to vector<16x128xf32>
    %28 = arith.addf %25, %27 : vector<16x128xf32>
    %c0_28 = arith.constant 0 : index
    %c0_29 = arith.constant 0 : index
    %c0_30 = arith.constant 0 : index
    %29 = vector.load %arg5[%c0_28, %c0_29, %c0_30] : memref<1x16x128xf32, #tpu.memory_space<vmem>>, vector<1x16x128xf32>
    %30 = vector.shape_cast %29 : vector<1x16x128xf32> to vector<16x128xf32>
    %31 = vector.shape_cast %28 : vector<16x128xf32> to vector<1x16x128xf32>
    tpu.vector_store %arg5[%c0_28, %c0_29, %c0_30], %31 {strides = array<i32>} : memref<1x16x128xf32, #tpu.memory_space<vmem>>, vector<1x16x128xf32>,
    return
  }
  func.func @transform_0(%arg0: i32) -> (i32, i32, i32) {
    %c0_i32 = arith.constant 0 : i32
    %c0_i32_0 = arith.constant 0 : i32
    %c0_i32_1 = arith.constant 0 : i32
    return %arg0, %c0_i32, %c0_i32_0 : i32, i32, i32
  }
  func.func @transform_1(%arg0: i32) -> (i32, i32, i32) {
    %c0_i32 = arith.constant 0 : i32
    %c0_i32_0 = arith.constant 0 : i32
    %c0_i32_1 = arith.constant 0 : i32
    %c0_i32_2 = arith.constant 0 : i32
    return %c0_i32, %c0_i32_0, %c0_i32_1 : i32, i32, i32
  }
  func.func @transform_2(%arg0: i32) -> (i32, i32) {
    %c0_i32 = arith.constant 0 : i32
    %c0_i32_0 = arith.constant 0 : i32
    %c0_i32_1 = arith.constant 0 : i32
    return %c0_i32, %c0_i32_0 : i32, i32
  }
  func.func @transform_3(%arg0: i32) -> (i32, i32) {
    %c0_i32 = arith.constant 0 : i32
    %c0_i32_0 = arith.constant 0 : i32
    %c0_i32_1 = arith.constant 0 : i32
    return %c0_i32, %c0_i32_0 : i32, i32
  }
  func.func @transform_4(%arg0: i32) -> (i32, i32, i32) {
    %c0_i32 = arith.constant 0 : i32
    %c0_i32_0 = arith.constant 0 : i32
    %c0_i32_1 = arith.constant 0 : i32
    return %arg0, %c0_i32, %c0_i32_0 : i32, i32, i32
  }
}

</mosaic_0001>

<llo_original>
// kernel: spectral_norm_conv_forward.2
$region0: #{spectral_norm_conv_forward.2}
  #allocation0 [shape = 'u32[]', space=smem, size = 0x4, offset = 0x4, fixed_abs, tag = 'smem constant byte address 0x4 - core index']
  #allocation1 [shape = 'u32[72,128]{1,0:T(1,128)}', space=vmem, size = 0x9000, scoped, tag = 'internal scratch']
  %s0 = inlined_call_operand.vmem [shape: f32[8,36], index: 0, kind: input, shape index: {}]
  %s1 = inlined_call_operand.vmem [shape: f32[8,1], index: 1, kind: input, shape index: {}]
  %s2 = inlined_call_operand.vmem [shape: f32[1,36], index: 2, kind: input, shape index: {}]
  %s3 = inlined_call_operand.vmem [shape: f32[8,1], index: 3, kind: output, shape index: {0}]
  %s4 = inlined_call_operand.hbm [shape: f32[1,36], index: 4, kind: output, shape index: {1}]
  %s5 = inlined_call_operand.hbm [shape: f32[1,1], index: 5, kind: output, shape index: {2}]
  %6 = xla_tuple %s3, %s4, %s5
  %s7 = sld [smem:[#allocation0]]
  $region38: #{spectral_norm_conv_forward.2} parent=0
    _
  %s9 = ssub.s32 1, %s7
  %s10 = scalar_select 0, %s9, %s7
  $region1: #{spectral_norm_conv_forward.2} parent=0
    #allocation2 [shape = 'u8[512]{0}', space=vmem, size = 0x400, scoped, tag = 'output window, operand 1, single buffered']
    #allocation3 [shape = 's32[1]{0}', space=sflag, size = 0x4, scoped, tag = 'scoped memory for spectral_norm_conv_forward.2']
    #allocation4 [shape = 'u8[512]{0}', space=vmem, size = 0x400, scoped, tag = 'output window, operand 2, single buffered']
    #allocation5 [shape = 's32[1]{0}', space=sflag, size = 0x4, scoped, tag = 'scoped memory for spectral_norm_conv_forward.2']
    %11 = vsyncpa [#allocation3], 0
    %12 = vsyncpa [#allocation5], 0
    // Predicated region
    $region2: #{spectral_norm_conv_forward.2} parent=1 // pred_check
      _
    $region3: #{spectral_norm_conv_forward.2} parent=1 // pred_check_branch
      %14 = sbr.rel (0) target = $region5
    $region4: #{spectral_norm_conv_forward.2} parent=1 // pred_region
      _
    $region5: #{spectral_norm_conv_forward.2} parent=1 // pred_fallthru
      _
    // Predicated region
    $region6: #{spectral_norm_conv_forward.2} parent=1 // pred_check
      _
    $region7: #{spectral_norm_conv_forward.2} parent=1 // pred_check_branch
      %16 = sbr.rel (0) target = $region9
    $region8: #{spectral_norm_conv_forward.2} parent=1 // pred_region
      _
    $region9: #{spectral_norm_conv_forward.2} parent=1 // pred_fallthru
      _
    // Predicated region
    $region10: #{spectral_norm_conv_forward.2} parent=1 // pred_check
      _
    $region11: #{spectral_norm_conv_forward.2} parent=1 // pred_check_branch
      %18 = sbr.rel (0) target = $region13
    $region12: #{spectral_norm_conv_forward.2} parent=1 // pred_region
      _
    $region13: #{spectral_norm_conv_forward.2} parent=1 // pred_fallthru
      _
    %v19 = vld [vmem:[%s0] sm:$0xff]
    %v20 = vld [vmem:[%s1] sm:$0xff]
    %22 = vset.pattern.permute.xlu0 0
    %23 = vperm.xlu0 %22, %v20
    %v24 = vpop.permute.xlu0 %23
    %v26 = vmul.f32 %v19, %v24
    %vm27 = vcmask 293888
    %v28 = vsel %vm27, %v26, 0.0
    %v29 = vrot.slane %v28, 4
    %v30 = vadd.f32 %v28, %v29
    %v31 = vrot.slane %v30, 2
    %v32 = vadd.f32 %v30, %v31
    %v33 = vrot.slane %v32, 1
    %v34 = vadd.f32 %v32, %v33
    %v35 = vmul.f32 %v34, %v34
    %v36 = vsel %vm27, %v35, 0.0
    %37 = vadd.xlane.f32.xlu0 %v36
    %v38 = vpop.xlane.xlu0 %37
    %v39 = vrsqrt.pop %v38
    %v40 = vmul.f32 %v39, %v38
    %v41 = vmul.f32 %v40, %v39
    %v42 = vmul.f32 0.5, %v41
    %v43 = vsub.f32 1.5, %v42
    %v44 = vmul.f32 %v39, %v43
    %v45 = vmul.f32 %v38, %v44
    %vm46 = vcmp.eq.f32.partialorder %v38, inf
    %v47 = vsel %vm46, %v38, %v45
    %vm48 = vcmp.eq.f32.partialorder %v38, 0.0
    %v49 = vand.u32 %v38, 2147483648
    %v50 = vsel %vm48, %v49, %v47
    %v51 = vadd.f32 %v50, 1e-12
    %v52 = vrcp.pop %v51
    %v53 = vmul.f32 %v51, %v52
    %v54 = vsub.f32 1.0, %v53
    %v55 = vmul.f32 %v52, %v54
    %v56 = vadd.f32 %v52, %v55
    %vm57 = vweird.f32 %v51
    %vm58 = vweird.f32 %v52
    %vm59 = vmor %vm57, %vm58
    %v60 = vsel %vm59, %v52, %v56
    %v61 = vand.u32 2147483647, %v51
    %vm62 = vcmp.eq.f32.partialorder %v61, 8.507059e+37
    %v63 = vand.u32 %v51, 2147483648
    %v64 = vor.u32 1.1754944e-38, %v63
    %v65 = vsel %vm62, %v64, %v60
    %v66 = vmul.f32 %v34, %v65
    %v67 = vmul.f32 %v19, %v66
    %v68 = vsel %vm27, %v67, 0.0
    %69 = vadd.xlane.f32.xlu0 %v68
    %v70 = vpop.xlane.xlu0 %69
    %v71 = vmul.f32 %v70, %v70
    %v72 = vrot.slane %v71, 4
    %v73 = vadd.f32 %v71, %v72
    %v74 = vrot.slane %v73, 2
    %v75 = vadd.f32 %v73, %v74
    %v76 = vrot.slane %v75, 1
    %v77 = vadd.f32 %v75, %v76
    %v78 = vrsqrt.pop %v77
    %v79 = vmul.f32 %v78, %v77
    %v80 = vmul.f32 %v79, %v78
    %v81 = vmul.f32 0.5, %v80
    %v82 = vsub.f32 1.5, %v81
    %v83 = vmul.f32 %v78, %v82
    %v84 = vmul.f32 %v77, %v83
    %vm85 = vcmp.eq.f32.partialorder %v77, inf
    %v86 = vsel %vm85, %v77, %v84
    %vm87 = vcmp.eq.f32.partialorder %v77, 0.0
    %v88 = vand.u32 %v77, 2147483648
    %v89 = vsel %vm87, %v88, %v86
    %v90 = vadd.f32 %v89, 1e-12
    %v91 = vrcp.pop %v90
    %v92 = vmul.f32 %v90, %v91
    %v93 = vsub.f32 1.0, %v92
    %v94 = vmul.f32 %v91, %v93
    %v95 = vadd.f32 %v91, %v94
    %vm96 = vweird.f32 %v90
    %vm97 = vweird.f32 %v91
    %vm98 = vmor %vm96, %vm97
    %v99 = vsel %vm98, %v91, %v95
    %v100 = vand.u32 2147483647, %v90
    %vm101 = vcmp.eq.f32.partialorder %v100, 8.507059e+37
    %v102 = vand.u32 %v90, 2147483648
    %v103 = vor.u32 1.1754944e-38, %v102
    %v104 = vsel %vm101, %v103, %v99
    %v105 = vmul.f32 %v70, %v104
    %v106 = vmul.f32 %v105, %v70
    %v107 = vrot.slane %v106, 4
    %v108 = vadd.f32 %v106, %v107
    %v109 = vrot.slane %v108, 2
    %v110 = vadd.f32 %v108, %v109
    %v111 = vrot.slane %v110, 1
    %v112 = vadd.f32 %v110, %v111
    %vm113 = vcmask 7168
    %114 = vst.msk [vmem:[%s3] sm:$0xff] %vm113, %v105
    %vm115 = vcmask 286720
    %116 = vst.msk [vmem:[#allocation2] sm:$0x1] %vm115, %v66
    %vm117 = vcmask 0
    %118 = vst.msk [vmem:[#allocation4] sm:$0x1] %vm117, %v112
    // Predicated region
    $region14: #{spectral_norm_conv_forward.2} parent=1 // pred_check
      _
    $region15: #{spectral_norm_conv_forward.2} parent=1 // pred_check_branch
      %120 = sbr.rel (0) target = $region17
    $region16: #{spectral_norm_conv_forward.2} parent=1 // pred_region
      _
    $region17: #{spectral_norm_conv_forward.2} parent=1 // pred_fallthru
      _
    // Predicated region
    $region18: #{spectral_norm_conv_forward.2} parent=1 // pred_check
      _
    $region19: #{spectral_norm_conv_forward.2} parent=1 // pred_check_branch
      %122 = sbr.rel (0) target = $region21
    $region20: #{spectral_norm_conv_forward.2} parent=1 // pred_region
      %124 = vsyncadd [#allocation3], 0
      %s126 = sshll.u32 [#allocation2], 4
      %s127 = int_to_ptr.vmem [resolvable:$true] %s126
      %s128 = sshll.u32 %s4, 4
      %s129 = int_to_ptr.hbm [resolvable:$true] %s128
      %131 = dma.vmem_to_hbm [thread:$0]  %s127, 16, %s129, [#allocation3]
    $region21: #{spectral_norm_conv_forward.2} parent=1 // pred_fallthru
      _
    // Predicated region
    $region22: #{spectral_norm_conv_forward.2} parent=1 // pred_check
      _
    $region23: #{spectral_norm_conv_forward.2} parent=1 // pred_check_branch
      %133 = sbr.rel (0) target = $region25
    $region24: #{spectral_norm_conv_forward.2} parent=1 // pred_region
      %135 = vsyncadd [#allocation5], 0
      %s137 = sshll.u32 [#allocation4], 4
      %s138 = int_to_ptr.vmem [resolvable:$true] %s137
      %s139 = sshll.u32 %s5, 4
      %s140 = int_to_ptr.hbm [resolvable:$true] %s139
      %142 = dma.vmem_to_hbm [thread:$0]  %s138, 16, %s140, [#allocation5]
    $region25: #{spectral_norm_conv_forward.2} parent=1 // pred_fallthru
      _
    // Predicated region
    $region26: #{spectral_norm_conv_forward.2} parent=1 // pred_check
      _
    $region27: #{spectral_norm_conv_forward.2} parent=1 // pred_check_branch
      %144 = sbr.rel (0) target = $region29
    $region28: #{spectral_norm_conv_forward.2} parent=1 // pred_region
      _
    $region29: #{spectral_norm_conv_forward.2} parent=1 // pred_fallthru
      _
    // Predicated region
    $region30: #{spectral_norm_conv_forward.2} parent=1 // pred_check
      _
    $region31: #{spectral_norm_conv_forward.2} parent=1 // pred_check_branch
      %146 = sbr.rel (0) target = $region33
    $region32: #{spectral_norm_conv_forward.2} parent=1 // pred_region
      %148 = dma.done [#allocation3], 16
    $region33: #{spectral_norm_conv_forward.2} parent=1 // pred_fallthru
      _
    // Predicated region
    $region34: #{spectral_norm_conv_forward.2} parent=1 // pred_check
      _
    $region35: #{spectral_norm_conv_forward.2} parent=1 // pred_check_branch
      %150 = sbr.rel (0) target = $region37
    $region36: #{spectral_norm_conv_forward.2} parent=1 // pred_region
      %152 = dma.done [#allocation5], 16
    $region37: #{spectral_norm_conv_forward.2} parent=1 // pred_fallthru
      _
    %153 = vsyncpa [#allocation3], 1
    %154 = vsyncpa [#allocation5], 1

// kernel: spectral_norm_conv_forward.3
$region0: #{spectral_norm_conv_forward.3}
  #allocation0 [shape = 'u32[]', space=smem, size = 0x4, offset = 0x4, fixed_abs, tag = 'smem constant byte address 0x4 - core index']
  #allocation1 [shape = 'u32[72,128]{1,0:T(1,128)}', space=vmem, size = 0x9000, scoped, tag = 'internal scratch']
  #allocation2 [shape = 'f32[18,64]{1,0:T(8,128)}', space=vmem, size = 0x3000, scoped, tag = 'scratch operand']
  #allocation3 [shape = 'f32[1,1]{1,0:T(1,128)S(1)}', space=vmem, size = 0x200, scoped, tag = 'scoped memory for spectral_norm_conv_forward.3']
  %s0 = inlined_call_operand.vmem [shape: f32[2,16,64], index: 0, kind: input, shape index: {}]
  %s1 = inlined_call_operand.vmem [shape: f32[3,64,128], index: 1, kind: input, shape index: {}]
  %s2 = inlined_call_operand.vmem [shape: f32[1,128], index: 2, kind: input, shape index: {}]
  %s3 = inlined_call_operand.<no memory space> [shape: f32[1,1], index: 3, kind: input, shape index: {}]
  %s4 = inlined_call_operand.vmem [shape: f32[2,16,128], index: 4, kind: output, shape index: {}]
  %s5 = sld [smem:[#allocation0]]
  $region49: #{spectral_norm_conv_forward.3} parent=0
    _
  %s7 = ssub.s32 1, %s5
  %s8 = scalar_select 0, %s7, %s5
  %v9 = vstv %s3
  %10 = vst [vmem:[#allocation3] sm:$0x1] %v9
  loop: start=0, step=1, limit=4
  $region2: #{spectral_norm_conv_forward.3} parent=0 // loop_pre_header
    _
  $region3: #{spectral_norm_conv_forward.3} parent=0 // loop_header
    %s12 = sphi 0, %s16
    %p13 = scmp.ge.s32.totalorder %s12, 4
    %s22 = sphi 0, %s24
    %s25 = sphi 0, %s22
    %s26 = sphi 0, %s25
    %s42 = sphi 0, %s26
    %s46 = sphi 0, %s46
    %s48 = sphi 0, %s46
    %s49 = sphi 0, %s48
    %s63 = sphi 0, %s49
    %s67 = sphi 0, %s67
    %s69 = sphi 0, %s67
    %s70 = sphi 0, %s69
    %s84 = sphi 0, %s70
    %s88 = sphi 0, %s88
    %s90 = sphi 0, %s88
    %s91 = sphi 0, %s90
    %s105 = sphi 0, %s91
    %s111 = sphi 0, %s113
    %s114 = sphi 0, %s111
    %s115 = sphi 0, %s114
    %s131 = sphi 0, %s115
  $region4: #{spectral_norm_conv_forward.3} parent=0 // loop_header_branch
    %15 = sbr.rel (%p13) target = $region8
  $region5: #{spectral_norm_conv_forward.3} parent=0 // loop_body
    %s17 = ssub.s32 %s12, 1
    %s18 = ssub.s32 %s12, 2
    %s19 = sadd.s32 %s12, 1
    %s20 = ssub.s32 %s12, %s19
    %p21 = scmp.eq.s32.totalorder %s20, 0
    %s23 = sadd.s32 %s22, 1
    %s24 = scalar_select %p21, %s22, %s23
    %p27 = pneg %p21
    %p28 = scmp.eq.s32.totalorder %s12, 1
    %p29 = por %p27, %p28
    %p30 = scmp.ne.s32.totalorder %s22, %s25
    %p31 = scmp.eq.s32.totalorder %s12, 0
    %p32 = por %p30, %p31
    %p33 = scmp.ne.s32.totalorder %s22, %s25
    %p34 = scmp.eq.s32.totalorder %s17, 1
    %p35 = por %p33, %p34
    %p36 = scmp.ne.s32.totalorder %s25, %s26
    %p37 = scmp.eq.s32.totalorder %s17, 0
    %p38 = por %p36, %p37
    %p39 = scmp.ne.s32.totalorder %s25, %s26
    %p40 = scmp.eq.s32.totalorder %s18, 1
    %p41 = por %p39, %p40
    %p43 = scmp.ne.s32.totalorder %s26, %s42
    %p44 = scmp.eq.s32.totalorder %s18, 0
    %p45 = por %p43, %p44
    %s47 = sadd.s32 %s46, 1
    %p50 = scmp.eq.s32.totalorder %s12, 1
    %p51 = scmp.ne.s32.totalorder %s46, %s48
    %p52 = scmp.eq.s32.totalorder %s12, 0
    %p53 = por %p51, %p52
    %p54 = scmp.ne.s32.totalorder %s46, %s48
    %p55 = scmp.eq.s32.totalorder %s17, 1
    %p56 = por %p54, %p55
    %p57 = scmp.ne.s32.totalorder %s48, %s49
    %p58 = scmp.eq.s32.totalorder %s17, 0
    %p59 = por %p57, %p58
    %p60 = scmp.ne.s32.totalorder %s48, %s49
    %p61 = scmp.eq.s32.totalorder %s18, 1
    %p62 = por %p60, %p61
    %p64 = scmp.ne.s32.totalorder %s49, %s63
    %p65 = scmp.eq.s32.totalorder %s18, 0
    %p66 = por %p64, %p65
    %s68 = sadd.s32 %s67, 1
    %p71 = scmp.eq.s32.totalorder %s12, 1
    %p72 = scmp.ne.s32.totalorder %s67, %s69
    %p73 = scmp.eq.s32.totalorder %s12, 0
    %p74 = por %p72, %p73
    %p75 = scmp.ne.s32.totalorder %s67, %s69
    %p76 = scmp.eq.s32.totalorder %s17, 1
    %p77 = por %p75, %p76
    %p78 = scmp.ne.s32.totalorder %s69, %s70
    %p79 = scmp.eq.s32.totalorder %s17, 0
    %p80 = por %p78, %p79
    %p81 = scmp.ne.s32.totalorder %s69, %s70
    %p82 = scmp.eq.s32.totalorder %s18, 1
    %p83 = por %p81, %p82
    %p85 = scmp.ne.s32.totalorder %s70, %s84
    %p86 = scmp.eq.s32.totalorder %s18, 0
    %p87 = por %p85, %p86
    %s89 = sadd.s32 %s88, 1
    %p92 = scmp.eq.s32.totalorder %s12, 1
    %p93 = scmp.ne.s32.totalorder %s88, %s90
    %p94 = scmp.eq.s32.totalorder %s12, 0
    %p95 = por %p93, %p94
    %p96 = scmp.ne.s32.totalorder %s88, %s90
    %p97 = scmp.eq.s32.totalorder %s17, 1
    %p98 = por %p96, %p97
    %p99 = scmp.ne.s32.totalorder %s90, %s91
    %p100 = scmp.eq.s32.totalorder %s17, 0
    %p101 = por %p99, %p100
    %p102 = scmp.ne.s32.totalorder %s90, %s91
    %p103 = scmp.eq.s32.totalorder %s18, 1
    %p104 = por %p102, %p103
    %p106 = scmp.ne.s32.totalorder %s91, %s105
    %p107 = scmp.eq.s32.totalorder %s18, 0
    %p108 = por %p106, %p107
    %s109 = ssub.s32 %s12, %s19
    %p110 = scmp.eq.s32.totalorder %s109, 0
    %s112 = sadd.s32 %s111, 1
    %s113 = scalar_select %p110, %s111, %s112
    %p116 = pneg %p110
    %p117 = scmp.eq.s32.totalorder %s12, 1
    %p118 = por %p116, %p117
    %p119 = scmp.ne.s32.totalorder %s111, %s114
    %p120 = scmp.eq.s32.totalorder %s12, 0
    %p121 = por %p119, %p120
    %p122 = scmp.ne.s32.totalorder %s111, %s114
    %p123 = scmp.eq.s32.totalorder %s17, 1
    %p124 = por %p122, %p123
    %p125 = scmp.ne.s32.totalorder %s114, %s115
    %p126 = scmp.eq.s32.totalorder %s17, 0
    %p127 = por %p125, %p126
    %p128 = scmp.ne.s32.totalorder %s114, %s115
    %p129 = scmp.eq.s32.totalorder %s18, 1
    %p130 = por %p128, %p129
    %p132 = scmp.ne.s32.totalorder %s115, %s131
    %p133 = scmp.eq.s32.totalorder %s18, 0
    %p134 = por %p132, %p133
    %p135 = scmp.le.s32.totalorder 1, %s12
    %p136 = scmp.lt.s32.totalorder %s12, 3
    %p137 = pnand %p135, %p136
    %p138 = pneg %p137
    // Predicated region
    $region9: #{spectral_norm_conv_forward.3} parent=5 // pred_check
      _
    $region10: #{spectral_norm_conv_forward.3} parent=5 // pred_check_branch
      %140 = sbr.rel (%p137) target = $region12
    $region11: #{spectral_norm_conv_forward.3} parent=5 // pred_region
      %s141 = ssub.s32 %s12, 1
      // Predicated region
      $region13: #{spectral_norm_conv_forward.3} parent=11 // pred_check
        %p142 = pneg %p59
      $region14: #{spectral_norm_conv_forward.3} parent=11 // pred_check_branch
        %144 = sbr.rel (%p142) target = $region16
      $region15: #{spectral_norm_conv_forward.3} parent=11 // pred_region
        _
      $region16: #{spectral_norm_conv_forward.3} parent=11 // pred_fallthru
        _
      // Predicated region
      $region17: #{spectral_norm_conv_forward.3} parent=11 // pred_check
        %p145 = pneg %p80
      $region18: #{spectral_norm_conv_forward.3} parent=11 // pred_check_branch
        %147 = sbr.rel (%p145) target = $region20
      $region19: #{spectral_norm_conv_forward.3} parent=11 // pred_region
        _
      $region20: #{spectral_norm_conv_forward.3} parent=11 // pred_fallthru
        _
      // Predicated region
      $region21: #{spectral_norm_conv_forward.3} parent=11 // pred_check
        %p148 = pneg %p101
      $region22: #{spectral_norm_conv_forward.3} parent=11 // pred_check_branch
        %150 = sbr.rel (%p148) target = $region24
      $region23: #{spectral_norm_conv_forward.3} parent=11 // pred_region
        _
      $region24: #{spectral_norm_conv_forward.3} parent=11 // pred_fallthru
        _
    $region12: #{spectral_norm_conv_forward.3} parent=5 // pred_fallthru
      _
    %p151 = scmp.lt.s32.totalorder %s12, 2
    // Predicated region
    $region25: #{spectral_norm_conv_forward.3} parent=5 // pred_check
      %p152 = pneg %p151
    $region26: #{spectral_norm_conv_forward.3} parent=5 // pred_check_branch
      %154 = sbr.rel (%p152) target = $region28
    $region27: #{spectral_norm_conv_forward.3} parent=5 // pred_region
      // Predicated region
      $region29: #{spectral_norm_conv_forward.3} parent=27 // pred_check
        %p155 = pneg %p32
      $region30: #{spectral_norm_conv_forward.3} parent=27 // pred_check_branch
        %157 = sbr.rel (%p155) target = $region32
      $region31: #{spectral_norm_conv_forward.3} parent=27 // pred_region
        %p158 = scmp.lt.s32.totalorder %s12, 1
        %s159 = scalar_select %p158, %s12, 1
        %s160 = smul.addr %s159, 2
        %s161 = smul.addr %s160, 8
        %s162 = scalar_lea.vmem %s0, %s161
      $region32: #{spectral_norm_conv_forward.3} parent=27 // pred_fallthru
        _
    $region28: #{spectral_norm_conv_forward.3} parent=5 // pred_fallthru
      _
    %p163 = scmp.le.s32.totalorder 1, %s12
    %p164 = scmp.lt.s32.totalorder %s12, 3
    %p165 = pnand %p163, %p164
    %p166 = pneg %p165
    // Predicated region
    $region33: #{spectral_norm_conv_forward.3} parent=5 // pred_check
      _
    $region34: #{spectral_norm_conv_forward.3} parent=5 // pred_check_branch
      %168 = sbr.rel (%p165) target = $region36
    $region35: #{spectral_norm_conv_forward.3} parent=5 // pred_region
      %s169 = ssub.s32 %s12, 1
      %p170 = scmp.lt.s32.totalorder %s17, 1
      %s171 = scalar_select %p170, %s17, 1
      %s172 = smul.addr %s171, 2
      %s173 = smul.addr %s172, 8
      %s174 = scalar_lea.vmem %s0, %s173
      %p175 = pneg %p38
      %p176 = pneg %p35
      %p177 = pneg %p59
      %p178 = pneg %p56
      %p179 = pneg %p80
      %p180 = pneg %p77
      %p181 = pneg %p101
      %p182 = pneg %p98
      %p183 = pneg %p127
      %p184 = pneg %p124
      %p185 = scmp.lt.s32.totalorder %s17, 1
      %s186 = scalar_select %p185, %s17, 1
      %s187 = smul.addr %s186, 2
      %s188 = smul.addr %s187, 8
      %s189 = scalar_lea.vmem %s4, %s188
      %p190 = scmp.lt.s32.totalorder %s17, 1
      %s191 = scalar_select %p190, %s17, 1
      %s192 = smul.addr %s191, 2
      %s193 = smul.addr %s192, 8
      %s194 = scalar_lea.vmem %s0, %s193
      %p195 = scmp.lt.s32.totalorder %s17, 1
      %s196 = scalar_select %p195, %s17, 1
      %s197 = smul.addr %s196, 2
      %s198 = smul.addr %s197, 8
      %s199 = scalar_lea.vmem %s4, %s198
      %vm200 = vcmask 523264
      %201 = vst.msk [vmem:[#allocation2] sm:$0xff] %vm200, 0.0
      %202 = vst.msk [vmem:[#allocation2 + $0x8] sm:$0xff] %vm200, 0.0
      %vm203 = vcmask 517120
      %204 = vst.msk [vmem:[#allocation2 + $0x10] sm:$0x3] %vm203, 0.0
      %v205 = vld [vmem:[%s194] sm:$0xff]
      %v206 = vld [vmem:[%s194 + $0x8] sm:$0xff]
      %207 = vst.msk [vmem:[#allocation2 + $0x1] sm:$0xff] %vm200, %v205
      %208 = vst.msk [vmem:[#allocation2 + $0x9] sm:$0xff] %vm200, %v206
      %v209 = vld [vmem:[#allocation2] sm:$0xff]
      %v210 = vld [vmem:[#allocation2 + $0x8] sm:$0xff]
      %v211 = vld [vmem:[%s1] sm:$0xff]
      %v212 = vld [vmem:[%s1 + $0x8] sm:$0xff]
      %v213 = vld [vmem:[%s1 + $0x10] sm:$0xff]
      %v214 = vld [vmem:[%s1 + $0x18] sm:$0xff]
      %v215 = vld [vmem:[%s1 + $0x20] sm:$0xff]
      %v216 = vld [vmem:[%s1 + $0x28] sm:$0xff]
      %v217 = vld [vmem:[%s1 + $0x30] sm:$0xff]
      %v218 = vld [vmem:[%s1 + $0x38] sm:$0xff]
      %v219 = vld [vmem:[#allocation2 + $0x1] sm:$0xff]
      %v220 = vld [vmem:[#allocation2 + $0x9] sm:$0xff]
      %s221 = scalar_lea.vmem %s1, 64
      %v222 = vld [vmem:[%s221] sm:$0xff]
      %v223 = vld [vmem:[%s221 + $0x8] sm:$0xff]
      %v224 = vld [vmem:[%s221 + $0x10] sm:$0xff]
      %v225 = vld [vmem:[%s221 + $0x18] sm:$0xff]
      %v226 = vld [vmem:[%s221 + $0x20] sm:$0xff]
      %v227 = vld [vmem:[%s221 + $0x28] sm:$0xff]
      %v228 = vld [vmem:[%s221 + $0x30] sm:$0xff]
      %v229 = vld [vmem:[%s221 + $0x38] sm:$0xff]
      %v231 = vsel %vm200, %v219, 0
      %v234 = vsel %vm200, %v220, 0
      %236 = vmatpush.msra.mxu0 0.0
      %237 = vmatpush.msra.mxu0 0.0
      %238 = vmatpush.msra.mxu0 0.0
      %239 = vmatpush.msra.mxu0 0.0
      %240 = vmatpush.msra.mxu0 0.0
      %241 = vmatpush.msra.mxu0 0.0
      %242 = vmatpush.msra.mxu0 0.0
      %243 = vmatpush.msra.mxu0 0.0
      %244 = vmatpush.msra.mxu0 %v229
      %245 = vmatpush.msra.mxu0 %v228
      %246 = vmatpush.msra.mxu0 %v227
      %247 = vmatpush.msra.mxu0 %v226
      %248 = vmatpush.msra.mxu0 %v225
      %249 = vmatpush.msra.mxu0 %v224
      %250 = vmatpush.msra.mxu0 %v223
      %251 = vmatpush.msra.mxu0 %v222
      %252 = vmatmul.f32.gmra.mxu0 %v231
      %v253 = vpop.f32.mrf.mxu0
      %v254 = vadd.f32 0.0, %v253
      %255 = vmatmul.f32.gmra.mxu0 %v234
      %v256 = vpop.f32.mrf.mxu0
      %v257 = vadd.f32 0.0, %v256
      %258 = vdwg.mxu0
      %v260 = vsel %vm200, %v209, 0
      %v263 = vsel %vm200, %v210, 0
      %265 = vmatpush.msra.mxu0 0.0
      %266 = vmatpush.msra.mxu0 0.0
      %267 = vmatpush.msra.mxu0 0.0
      %268 = vmatpush.msra.mxu0 0.0
      %269 = vmatpush.msra.mxu0 0.0
      %270 = vmatpush.msra.mxu0 0.0
      %271 = vmatpush.msra.mxu0 0.0
      %272 = vmatpush.msra.mxu0 0.0
      %273 = vmatpush.msra.mxu0 %v218
      %274 = vmatpush.msra.mxu0 %v217
      %275 = vmatpush.msra.mxu0 %v216
      %276 = vmatpush.msra.mxu0 %v215
      %277 = vmatpush.msra.mxu0 %v214
      %278 = vmatpush.msra.mxu0 %v213
      %279 = vmatpush.msra.mxu0 %v212
      %280 = vmatpush.msra.mxu0 %v211
      %281 = vmatmul.f32.gmra.mxu0 %v260
      %v282 = vpop.f32.mrf.mxu0
      %v283 = vadd.f32 %v254, %v282
      %284 = vmatmul.f32.gmra.mxu0 %v263
      %v285 = vpop.f32.mrf.mxu0
      %v286 = vadd.f32 %v257, %v285
      %287 = vdwg.mxu0
      %v288 = vld [vmem:[#allocation2 + $0x2] sm:$0xff]
      %v289 = vld [vmem:[#allocation2 + $0xa] sm:$0xff]
      %s290 = scalar_lea.vmem %s1, 128
      %v291 = vld [vmem:[%s290] sm:$0xff]
      %v292 = vld [vmem:[%s290 + $0x8] sm:$0xff]
      %v293 = vld [vmem:[%s290 + $0x10] sm:$0xff]
      %v294 = vld [vmem:[%s290 + $0x18] sm:$0xff]
      %v295 = vld [vmem:[%s290 + $0x20] sm:$0xff]
      %v296 = vld [vmem:[%s290 + $0x28] sm:$0xff]
      %v297 = vld [vmem:[%s290 + $0x30] sm:$0xff]
      %v298 = vld [vmem:[%s290 + $0x38] sm:$0xff]
      %v300 = vsel %vm200, %v288, 0
      %v303 = vsel %vm200, %v289, 0
      %305 = vmatpush.msra.mxu0 0.0
      %306 = vmatpush.msra.mxu0 0.0
      %307 = vmatpush.msra.mxu0 0.0
      %308 = vmatpush.msra.mxu0 0.0
      %309 = vmatpush.msra.mxu0 0.0
      %310 = vmatpush.msra.mxu0 0.0
      %311 = vmatpush.msra.mxu0 0.0
      %312 = vmatpush.msra.mxu0 0.0
      %313 = vmatpush.msra.mxu0 %v298
      %314 = vmatpush.msra.mxu0 %v297
      %315 = vmatpush.msra.mxu0 %v296
      %316 = vmatpush.msra.mxu0 %v295
      %317 = vmatpush.msra.mxu0 %v294
      %318 = vmatpush.msra.mxu0 %v293
      %319 = vmatpush.msra.mxu0 %v292
      %320 = vmatpush.msra.mxu0 %v291
      %321 = vmatmul.f32.gmra.mxu0 %v300
      %v322 = vpop.f32.mrf.mxu0
      %v323 = vadd.f32 0.0, %v322
      %324 = vmatmul.f32.gmra.mxu0 %v303
      %v325 = vpop.f32.mrf.mxu0
      %v326 = vadd.f32 0.0, %v325
      %327 = vdwg.mxu0
      %v328 = vadd.f32 %v283, %v323
      %v329 = vadd.f32 %v286, %v326
      %v330 = vld [vmem:[#allocation3] sm:$0x1]
      %s331 = vtos %v330
      %v332 = vstv %s331
      %v333 = vrcp.pop %v332
      %v334 = vmul.f32 %v332, %v333
      %v335 = vsub.f32 1.0, %v334
      %v336 = vmul.f32 %v333, %v335
      %v337 = vadd.f32 %v333, %v336
      %vm338 = vweird.f32 %v332
      %vm339 = vweird.f32 %v333
      %vm340 = vmor %vm338, %vm339
      %v341 = vsel %vm340, %v333, %v337
      %v342 = vand.u32 2147483647, %v332
      %vm343 = vcmp.eq.f32.partialorder %v342, 8.507059e+37
      %v344 = vand.u32 %v332, 2147483648
      %v345 = vor.u32 1.1754944e-38, %v344
      %v346 = vsel %vm343, %v345, %v341
      %s347 = vtos %v346
      %v348 = vstv %s347
      %v349 = vmul.f32 %v328, %v348
      %v350 = vmul.f32 %v329, %v348
      %v351 = vld [vmem:[%s2] sm:$0x1]
      %v353 = vperm.slane %v351, 0
      %v355 = vadd.f32 %v349, %v353
      %v356 = vadd.f32 %v350, %v353
      %357 = vst [vmem:[%s199] sm:$0xff] %v355
      %358 = vst [vmem:[%s199 + $0x8] sm:$0xff] %v356
      %p359 = scmp.lt.s32.totalorder %s17, 1
      %s360 = scalar_select %p359, %s17, 1
      %s361 = smul.addr %s360, 2
      %s362 = smul.addr %s361, 8
      %s363 = scalar_lea.vmem %s4, %s362
      // Predicated region
      $region37: #{spectral_norm_conv_forward.3} parent=35 // pred_check
        %p364 = pneg %p124
      $region38: #{spectral_norm_conv_forward.3} parent=35 // pred_check_branch
        %366 = sbr.rel (%p364) target = $region40
      $region39: #{spectral_norm_conv_forward.3} parent=35 // pred_region
        _
      $region40: #{spectral_norm_conv_forward.3} parent=35 // pred_fallthru
        _
    $region36: #{spectral_norm_conv_forward.3} parent=5 // pred_fallthru
      _
    %p367 = scmp.le.s32.totalorder 2, %s12
    // Predicated region
    $region41: #{spectral_norm_conv_forward.3} parent=5 // pred_check
      %p368 = pneg %p367
    $region42: #{spectral_norm_conv_forward.3} parent=5 // pred_check_branch
      %370 = sbr.rel (%p368) target = $region44
    $region43: #{spectral_norm_conv_forward.3} parent=5 // pred_region
      %s371 = ssub.s32 %s12, 2
      // Predicated region
      $region45: #{spectral_norm_conv_forward.3} parent=43 // pred_check
        %p372 = pneg %p130
      $region46: #{spectral_norm_conv_forward.3} parent=43 // pred_check_branch
        %374 = sbr.rel (%p372) target = $region48
      $region47: #{spectral_norm_conv_forward.3} parent=43 // pred_region
        %p375 = scmp.lt.s32.totalorder %s18, 1
        %s376 = scalar_select %p375, %s18, 1
        %s377 = smul.addr %s376, 2
        %s378 = smul.addr %s377, 8
        %s379 = scalar_lea.vmem %s4, %s378
      $region48: #{spectral_norm_conv_forward.3} parent=43 // pred_fallthru
        _
    $region44: #{spectral_norm_conv_forward.3} parent=5 // pred_fallthru
      _
  $region6: #{spectral_norm_conv_forward.3} parent=0 // loop_footer
    %s16 = sadd.s32 1, %s12
  $region7: #{spectral_norm_conv_forward.3} parent=0 // loop_footer_branch
    %11 = sbr.rel target = $region3
  $region8: #{spectral_norm_conv_forward.3} parent=0 // loop_exit
    _

</llo_original>
